<compile_context>
chip_gen: v6e
topology: v6e:2x2x1
jax: 0.10.0
libtpu: 0.0.40
codegen_flags: <defaults>
</compile_context>

<pallas_src>
from functools import partial

import jax
import jax.numpy as jnp
from jax.experimental import pallas as pl
from jax.experimental.pallas import tpu as pltpu

N_FEAT = 5      # fc1 in_features
N_HID = 5       # fc1 out_features / fc2 in_features
N_HID_PAD = 8   # hidden dim zero-padded to one sublane group (pad rows are inert)


def _round_up(n, m):
    return ((n + m - 1) // m) * m


def _pick_tile_config():
    """Generation-aware (tile_b, vmem_limit_bytes) defaults.

    Per-step VMEM is dominated by the double-buffered x block: a (tile_b, 5)
    f32 block is lane-padded to (tile_b, 128) in VMEM, i.e. ~1 KiB/sample over
    both buffers.  128-MiB parts (v5e/v6e) take a 64K lane tile comfortably;
    the 64-MiB v7x (and unknown targets) stay at 32K with a 48 MiB limit.
    """
    try:
        kind = jax.devices()[0].device_kind.lower()
    except Exception:
        kind = ""
    if "v5" in kind or "v6" in kind:           # 128 MiB physical VMEM
        return 65536, 100 * 1024 * 1024
    return 32768, 48 * 1024 * 1024             # v7x (64 MiB) & conservative default


def _patient_risk_kernel(x_ref, w1_ref, b1_ref, w2_ref, b2_ref, o_ref, *, chunk):
    """One grid step = one batch tile.

    x_ref : (tile_b, 5)   VMEM  samples on sublanes (raw HBM row-blocks)
    w1_ref: (8, 5)        VMEM  fc1 weight, out-dim zero-padded 5->8
    b1_ref: (8, 1)        VMEM
    w2_ref: (8, 1)        VMEM  fc2 weight as a column
    b2_ref: (1, 1)        VMEM
    o_ref : (1, tile_b)   VMEM  risk scores, batch on lanes (lane-dense)
    """
    tile_b = o_ref.shape[-1]
    n_chunks = tile_b // chunk

    # Constant block index -> Pallas keeps these resident across all grid steps.
    w1 = w1_ref[...]          # (8, 5)
    b1 = b1_ref[...]          # (8, 1)
    w2 = w2_ref[...]          # (8, 1)
    b2 = b2_ref[...]          # (1, 1)

    # Chunked inner loop bounds vreg pressure: each iteration only touches a
    # (chunk, 5) x slab (chunk/8 vregs) and an (8, chunk) hidden tile.
    @pl.loop(0, n_chunks)
    def _(c):
        start = pl.multiple_of(c * chunk, chunk)
        xc = x_ref[pl.ds(start, chunk), :]                        # (chunk, 5)
        # hT[j, s] = sum_k w1[j, k] * x[s, k] -- contraction on the last dim of
        # both operands; the MXU does the sublane->lane relayout implicitly and
        # hT comes out lane-dense in samples.
        hT = jax.lax.dot_general(
            w1, xc, (((1,), (1,)), ((), ())),
            preferred_element_type=jnp.float32)                   # (8, chunk)
        hT = jnp.maximum(hT + b1, 0.0)                            # ReLU (VPU)
        # fc2 as a cross-sublane reduce (XLU) -- padded rows contribute zero.
        z = jnp.sum(hT * w2, axis=0, keepdims=True) + b2          # (1, chunk)
        o_ref[:, pl.ds(start, chunk)] = jax.nn.sigmoid(z)         # exp on EUP


@partial(jax.jit, static_argnames=("tile_b", "chunk", "vmem_limit_bytes"))
def _forward(x, w1, b1, w2, b2, *, tile_b, chunk, vmem_limit_bytes):
    B = x.shape[0]
    n_tiles = pl.cdiv(B, tile_b)
    bp = n_tiles * tile_b

    x = x.astype(jnp.float32)
    # Zero-pad the hidden dim 5 -> 8 (one sublane group); pad rows are inert:
    # relu(0*x + 0) = 0 and they are weighted by 0 in fc2.
    w1p = jnp.zeros((N_HID_PAD, N_FEAT), jnp.float32).at[:N_HID].set(
        w1.astype(jnp.float32).reshape(N_HID, N_FEAT))
    b1p = jnp.zeros((N_HID_PAD, 1), jnp.float32).at[:N_HID].set(
        b1.astype(jnp.float32).reshape(N_HID, 1))
    w2p = jnp.zeros((N_HID_PAD, 1), jnp.float32).at[:N_HID].set(
        w2.astype(jnp.float32).reshape(N_HID, 1))
    b2p = b2.astype(jnp.float32).reshape(1, 1)

    out = pl.pallas_call(
        partial(_patient_risk_kernel, chunk=chunk),
        out_shape=jax.ShapeDtypeStruct((n_tiles, 1, tile_b), jnp.float32),
        grid=(n_tiles,),
        in_specs=[
            # Contiguous row-blocks of the untouched (B, 5) input; the last
            # block may be partial -- padded reads are discarded via the
            # wrapper-side slice of the (exactly tiled) output.
            pl.BlockSpec((tile_b, N_FEAT), lambda i: (i, 0)),
            pl.BlockSpec((N_HID_PAD, N_FEAT), lambda i: (0, 0)),   # w1 (resident)
            pl.BlockSpec((N_HID_PAD, 1), lambda i: (0, 0)),        # b1 (resident)
            pl.BlockSpec((N_HID_PAD, 1), lambda i: (0, 0)),        # w2 (resident)
            pl.BlockSpec((1, 1), lambda i: (0, 0)),                # b2 (resident)
        ],
        # Leading grid dim squeezed out of the kernel view -> (1, tile_b) ref,
        # lane-dense output rows.
        out_specs=pl.BlockSpec((None, 1, tile_b), lambda i: (i, 0, 0)),
        compiler_params=pltpu.CompilerParams(
            dimension_semantics=("parallel",),   # megacore sharding on v7x
            vmem_limit_bytes=vmem_limit_bytes,
        ),
        cost_estimate=pl.CostEstimate(
            flops=70 * B, transcendentals=B, bytes_accessed=24 * B),
    )(x, w1p, b1p, w2p, b2p)

    out_flat = out.reshape(bp, 1)      # free: contiguous, tile-major == batch order
    # Slice only when the batch is not tile-aligned.
    return out_flat if bp == B else out_flat[:B]


def patient_risk_forward(x, w1, b1, w2, b2, *, tile_b=None, chunk=256,
                         vmem_limit_bytes=None):
    """x: (B, 5); w1: (5, 5) [out, in]; b1: (5,); w2: (1, 5) [out, in]; b2: (1,).

    Returns (B, 1) f32, matching sigmoid(relu(x @ w1.T + b1) @ w2.T + b2).
    """
    B, f = x.shape
    if f != N_FEAT:
        raise ValueError(f"expected (B, {N_FEAT}) input, got {x.shape}")
    d_tile, d_vmem = _pick_tile_config()
    tile_b = int(d_tile if tile_b is None else tile_b)
    vmem_limit_bytes = int(d_vmem if vmem_limit_bytes is None else vmem_limit_bytes)
    chunk = int(chunk)
    if chunk <= 0 or chunk % 128 != 0:
        raise ValueError("chunk must be a positive multiple of 128")
    # Never allocate a tile (much) larger than the batch itself.
    tile_b = min(tile_b, _round_up(B, chunk))
    if tile_b % chunk != 0:
        raise ValueError("tile_b must be a multiple of chunk")
    return _forward(x, w1, b1, w2, b2, tile_b=tile_b, chunk=chunk,
                    vmem_limit_bytes=vmem_limit_bytes)


def init_params(key):
    """Deterministic parameter init matching nn.Linear shapes."""
    k1, k2, k3, k4 = jax.random.split(key, 4)
    bound = 1.0 / jnp.sqrt(5.0)
    w1 = jax.random.uniform(k1, (5, 5), jnp.float32, -bound, bound)   # (out, in)
    b1 = jax.random.uniform(k2, (5,), jnp.float32, -bound, bound)
    w2 = jax.random.uniform(k3, (1, 5), jnp.float32, -bound, bound)   # (out, in)
    b2 = jax.random.uniform(k4, (1,), jnp.float32, -bound, bound)
    return w1, b1, w2, b2


if __name__ == "__main__":
    key = jax.random.PRNGKey(0)
    kx, kp = jax.random.split(key)

    batch = 3000   # deliberately not tile-aligned: exercises the partial last block
    x = jax.random.normal(kx, (batch, N_FEAT), jnp.float32)
    w1, b1, w2, b2 = init_params(kp)

    # Reference in plain JAX (same math as the PyTorch module).
    ref = jax.nn.sigmoid(jnp.maximum(x @ w1.T + b1, 0.0) @ w2.T + b2)

    # 1) Generation-tuned defaults (tile clamps down to the small demo batch).
    out = jax.block_until_ready(patient_risk_forward(x, w1, b1, w2, b2))
    assert out.shape == (batch, 1), out.shape
    assert jnp.allclose(out, ref, atol=1e-3, rtol=1e-3), "mismatch vs reference"

    # 2) Small explicit tile: multi-step grid, pipelining and partial last block.
    out2 = jax.block_until_ready(
        patient_risk_forward(x, w1, b1, w2, b2, tile_b=1024, chunk=256))
    assert out2.shape == (batch, 1), out2.shape
    assert jnp.allclose(out2, ref, atol=1e-3, rtol=1e-3), "mismatch vs reference"

    print("KERNEL_OK")
</pallas_src>

<mosaic_0001>
module attributes {stable_mosaic.version = 11 : i64} {
  func.func @_patient_risk_kernel(%arg0: i32, %arg1: memref<3072x5xf32, #tpu.memory_space<vmem>>, %arg2: memref<8x5xf32, #tpu.memory_space<vmem>>, %arg3: memref<8x1xf32, #tpu.memory_space<vmem>>, %arg4: memref<8x1xf32, #tpu.memory_space<vmem>>, %arg5: memref<1x1xf32, #tpu.memory_space<vmem>>, %arg6: memref<1x1x3072xf32, #tpu.memory_space<vmem>>) attributes {dimension_semantics = [#tpu.dimension_semantics<parallel>], iteration_bounds = array<i64: 1>, scalar_prefetch = 0 : i64, scratch_operands = 0 : i64, tpu.core_type = #tpu.core_type<tc>, window_params = [{transform_indices = @transform_0, window_bounds = array<i64: 3072, 5>}, {pipeline_mode = #tpu.pipeline_mode<synchronous>, transform_indices = @transform_1, window_bounds = array<i64: 8, 5>}, {pipeline_mode = #tpu.pipeline_mode<synchronous>, transform_indices = @transform_2, window_bounds = array<i64: 8, 1>}, {pipeline_mode = #tpu.pipeline_mode<synchronous>, transform_indices = @transform_3, window_bounds = array<i64: 8, 1>}, {pipeline_mode = #tpu.pipeline_mode<synchronous>, transform_indices = @transform_4, window_bounds = array<i64: 1, 1>}, {transform_indices = @transform_5, window_bounds = array<i64: 1, 1, 3072>}]} {
    %c0 = arith.constant 0 : index
    %c0_0 = arith.constant 0 : index
    %0 = vector.load %arg2[%c0, %c0_0] : memref<8x5xf32, #tpu.memory_space<vmem>>, vector<8x5xf32>
    %c0_1 = arith.constant 0 : index
    %c0_2 = arith.constant 0 : index
    %1 = vector.load %arg3[%c0_1, %c0_2] : memref<8x1xf32, #tpu.memory_space<vmem>>, vector<8x1xf32>
    %c0_3 = arith.constant 0 : index
    %c0_4 = arith.constant 0 : index
    %2 = vector.load %arg4[%c0_3, %c0_4] : memref<8x1xf32, #tpu.memory_space<vmem>>, vector<8x1xf32>
    %c0_5 = arith.constant 0 : index
    %c0_6 = arith.constant 0 : index
    %3 = vector.load %arg5[%c0_5, %c0_6] : memref<1x1xf32, #tpu.memory_space<vmem>>, vector<1x1xf32>
    %c0_i32 = arith.constant 0 : i32
    %c12_i32 = arith.constant 12 : i32
    %4 = arith.addi %c0_i32, %c12_i32 : i32
    %c1_i32 = arith.constant 1 : i32
    scf.for %arg7 = %c0_i32 to %4 step %c1_i32  : i32 {
      %c1_i32_8 = arith.constant 1 : i32
      %5 = arith.muli %arg7, %c1_i32_8 : i32
      %c0_i32_9 = arith.constant 0 : i32
      %6 = arith.addi %c0_i32_9, %5 : i32
      %c256_i32 = arith.constant 256 : i32
      %7 = arith.muli %6, %c256_i32 : i32
      %8 = tpu.assume_multiple %7, 256 : i32
      %9 = arith.index_cast %8 : i32 to index
      %c0_10 = arith.constant 0 : index
      %10 = vector.load %arg1[%9, %c0_10] : memref<3072x5xf32, #tpu.memory_space<vmem>>, vector<256x5xf32>
      %cst = arith.constant dense<0.000000e+00> : vector<8x256xf32>
      %11 = tpu.matmul %0, %10, %cst {dimension_numbers = #tpu.dot_dimension_numbers<[1], [1], [0], [0], [0, 0, 1, 0], [], []>} : vector<8x5xf32>, vector<256x5xf32>, vector<8x256xf32> -> vector<8x256xf32>
      %12 = vector.broadcast %1 : vector<8x1xf32> to vector<8x256xf32>
      %13 = arith.addf %11, %12 : vector<8x256xf32>
      %cst_11 = arith.constant 0.000000e+00 : f32
      %14 = vector.broadcast %cst_11 : f32 to vector<8x256xf32>
      %15 = arith.maximumf %13, %14 : vector<8x256xf32>
      %16 = vector.broadcast %2 : vector<8x1xf32> to vector<8x256xf32>
      %17 = arith.mulf %15, %16 : vector<8x256xf32>
      %cst_12 = arith.constant dense<0.000000e+00> : vector<256xf32>
      %18 = vector.multi_reduction <add>, %17, %cst_12 [0] : vector<8x256xf32> to vector<256xf32>
      %19 = vector.shape_cast %18 : vector<256xf32> to vector<1x256xf32>
      %20 = vector.broadcast %3 : vector<1x1xf32> to vector<1x256xf32>
      %21 = arith.addf %19, %20 : vector<1x256xf32>
      %22 = arith.negf %21 : vector<1x256xf32>
      %23 = math.exp %22 : vector<1x256xf32>
      %cst_13 = arith.constant 1.000000e+00 : f32
      %24 = vector.broadcast %cst_13 : f32 to vector<1x256xf32>
      %25 = arith.addf %24, %23 : vector<1x256xf32>
      %26 = arith.divf %24, %25 : vector<1x256xf32>
      %c0_14 = arith.constant 0 : index
      %c0_15 = arith.constant 0 : index
      %27 = arith.index_cast %8 : i32 to index
      %28 = vector.load %arg6[%c0_14, %c0_15, %27] : memref<1x1x3072xf32, #tpu.memory_space<vmem>>, vector<1x1x256xf32>
      %29 = vector.shape_cast %28 : vector<1x1x256xf32> to vector<1x256xf32>
      %30 = vector.shape_cast %26 : vector<1x256xf32> to vector<1x1x256xf32>
      tpu.vector_store %arg6[%c0_14, %c0_15, %27], %30 {strides = array<i32>} : memref<1x1x3072xf32, #tpu.memory_space<vmem>>, vector<1x1x256xf32>,
    }
    %c12_i32_7 = arith.constant 12 : i32
    return
  }
  func.func @transform_0(%arg0: i32) -> (i32, i32) {
    %c0_i32 = arith.constant 0 : i32
    %c0_i32_0 = arith.constant 0 : i32
    return %arg0, %c0_i32 : i32, i32
  }
  func.func @transform_1(%arg0: i32) -> (i32, i32) {
    %c0_i32 = arith.constant 0 : i32
    %c0_i32_0 = arith.constant 0 : i32
    %c0_i32_1 = arith.constant 0 : i32
    return %c0_i32, %c0_i32_0 : i32, i32
  }
  func.func @transform_2(%arg0: i32) -> (i32, i32) {
    %c0_i32 = arith.constant 0 : i32
    %c0_i32_0 = arith.constant 0 : i32
    %c0_i32_1 = arith.constant 0 : i32
    return %c0_i32, %c0_i32_0 : i32, i32
  }
  func.func @transform_3(%arg0: i32) -> (i32, i32) {
    %c0_i32 = arith.constant 0 : i32
    %c0_i32_0 = arith.constant 0 : i32
    %c0_i32_1 = arith.constant 0 : i32
    return %c0_i32, %c0_i32_0 : i32, i32
  }
  func.func @transform_4(%arg0: i32) -> (i32, i32) {
    %c0_i32 = arith.constant 0 : i32
    %c0_i32_0 = arith.constant 0 : i32
    %c0_i32_1 = arith.constant 0 : i32
    return %c0_i32, %c0_i32_0 : i32, i32
  }
  func.func @transform_5(%arg0: i32) -> (i32, i32, i32) {
    %c0_i32 = arith.constant 0 : i32
    %c0_i32_0 = arith.constant 0 : i32
    %c0_i32_1 = arith.constant 0 : i32
    return %arg0, %c0_i32, %c0_i32_0 : i32, i32, i32
  }
}

</mosaic_0001>

<llo_original>
// kernel: _forward.1
$region0: #{_forward.1}
  #allocation0 [shape = 'u32[]', space=smem, size = 0x4, offset = 0x4, fixed_abs, tag = 'smem constant byte address 0x4 - core index']
  #allocation1 [shape = 'u32[144,128]{1,0:T(1,128)}', space=vmem, size = 0x12000, scoped, tag = 'internal scratch']
  #allocation2 [shape = 'f32[1,1]{1,0:T(1,128)S(1)}', space=vmem, size = 0x200, scoped, tag = 'scoped memory for _forward.1']
  %s0 = inlined_call_operand.vmem [shape: f32[3000,5], index: 0, kind: input, shape index: {}]
  %s1 = inlined_call_operand.vmem [shape: f32[8,5], index: 1, kind: input, shape index: {}]
  %s2 = inlined_call_operand.vmem [shape: f32[8,1], index: 2, kind: input, shape index: {}]
  %s3 = inlined_call_operand.vmem [shape: f32[8,1], index: 3, kind: input, shape index: {}]
  %s4 = inlined_call_operand.<no memory space> [shape: f32[1,1], index: 4, kind: input, shape index: {}]
  %s5 = inlined_call_operand.vmem [shape: f32[1,1,3072], index: 5, kind: output, shape index: {}]
  %s6 = sld [smem:[#allocation0]]
  $region37: #{_forward.1} parent=0
    _
  %s8 = ssub.s32 1, %s6
  %s9 = scalar_select 0, %s8, %s6
  %v10 = vstv %s4
  %11 = vst [vmem:[#allocation2] sm:$0x1] %v10
  // Predicated region
  $region2: #{_forward.1} parent=0 // pred_check
    _
  $region3: #{_forward.1} parent=0 // pred_check_branch
    %13 = sbr.rel (0) target = $region5
  $region4: #{_forward.1} parent=0 // pred_region
    _
  $region5: #{_forward.1} parent=0 // pred_fallthru
    _
  // Predicated region
  $region6: #{_forward.1} parent=0 // pred_check
    _
  $region7: #{_forward.1} parent=0 // pred_check_branch
    %15 = sbr.rel (0) target = $region9
  $region8: #{_forward.1} parent=0 // pred_region
    _
  $region9: #{_forward.1} parent=0 // pred_fallthru
    _
  // Predicated region
  $region10: #{_forward.1} parent=0 // pred_check
    _
  $region11: #{_forward.1} parent=0 // pred_check_branch
    %17 = sbr.rel (0) target = $region13
  $region12: #{_forward.1} parent=0 // pred_region
    _
  $region13: #{_forward.1} parent=0 // pred_fallthru
    _
  // Predicated region
  $region14: #{_forward.1} parent=0 // pred_check
    _
  $region15: #{_forward.1} parent=0 // pred_check_branch
    %19 = sbr.rel (0) target = $region17
  $region16: #{_forward.1} parent=0 // pred_region
    _
  $region17: #{_forward.1} parent=0 // pred_fallthru
    _
  // Predicated region
  $region18: #{_forward.1} parent=0 // pred_check
    _
  $region19: #{_forward.1} parent=0 // pred_check_branch
    %21 = sbr.rel (0) target = $region21
  $region20: #{_forward.1} parent=0 // pred_region
    _
  $region21: #{_forward.1} parent=0 // pred_fallthru
    _
  %v22 = vld [vmem:[%s1] sm:$0xff]
  %v23 = vld [vmem:[%s2] sm:$0xff]
  %v24 = vld [vmem:[%s3] sm:$0xff]
  %v25 = vld [vmem:[#allocation2] sm:$0x1]
  loop: start=0, step=1, limit=12
  $region22: #{_forward.1} parent=0 // loop_pre_header
    _
  $region23: #{_forward.1} parent=0 // loop_header
    %s27 = sphi 0, %s31
    %p28 = scmp.ge.s32.totalorder %s27, 12
  $region24: #{_forward.1} parent=0 // loop_header_branch
    %30 = sbr.rel (%p28) target = $region28
  $region25: #{_forward.1} parent=0 // loop_body
    %s32 = smul.u32 %s27, 256
    %s33 = scalar_lea.vmem %s0, %s32
    %v34 = vld [vmem:[%s33] sm:$0xff]
    %v35 = vld [vmem:[%s33 + $0x8] sm:$0xff]
    %v36 = vld [vmem:[%s33 + $0x10] sm:$0xff]
    %v37 = vld [vmem:[%s33 + $0x18] sm:$0xff]
    %v38 = vld [vmem:[%s33 + $0x20] sm:$0xff]
    %v39 = vld [vmem:[%s33 + $0x28] sm:$0xff]
    %v40 = vld [vmem:[%s33 + $0x30] sm:$0xff]
    %v41 = vld [vmem:[%s33 + $0x38] sm:$0xff]
    %v42 = vld [vmem:[%s33 + $0x40] sm:$0xff]
    %v43 = vld [vmem:[%s33 + $0x48] sm:$0xff]
    %v44 = vld [vmem:[%s33 + $0x50] sm:$0xff]
    %v45 = vld [vmem:[%s33 + $0x58] sm:$0xff]
    %v46 = vld [vmem:[%s33 + $0x60] sm:$0xff]
    %v47 = vld [vmem:[%s33 + $0x68] sm:$0xff]
    %v48 = vld [vmem:[%s33 + $0x70] sm:$0xff]
    %v49 = vld [vmem:[%s33 + $0x78] sm:$0xff]
    %v50 = vld [vmem:[%s33 + $0x80] sm:$0xff]
    %v51 = vld [vmem:[%s33 + $0x88] sm:$0xff]
    %v52 = vld [vmem:[%s33 + $0x90] sm:$0xff]
    %v53 = vld [vmem:[%s33 + $0x98] sm:$0xff]
    %v54 = vld [vmem:[%s33 + $0xa0] sm:$0xff]
    %v55 = vld [vmem:[%s33 + $0xa8] sm:$0xff]
    %v56 = vld [vmem:[%s33 + $0xb0] sm:$0xff]
    %v57 = vld [vmem:[%s33 + $0xb8] sm:$0xff]
    %v58 = vld [vmem:[%s33 + $0xc0] sm:$0xff]
    %v59 = vld [vmem:[%s33 + $0xc8] sm:$0xff]
    %v60 = vld [vmem:[%s33 + $0xd0] sm:$0xff]
    %v61 = vld [vmem:[%s33 + $0xd8] sm:$0xff]
    %v62 = vld [vmem:[%s33 + $0xe0] sm:$0xff]
    %v63 = vld [vmem:[%s33 + $0xe8] sm:$0xff]
    %v64 = vld [vmem:[%s33 + $0xf0] sm:$0xff]
    %v65 = vld [vmem:[%s33 + $0xf8] sm:$0xff]
    %67 = vset.pattern.permute.xlu0 0
    %68 = vperm.xlu0 %67, %v23
    %v69 = vpop.permute.xlu0 %68
    %vm71 = vcmask 39936
    %v73 = vsel %vm71, %v22, 0
    %v76 = vsel %vm71, %v34, 0
    %v79 = vsel %vm71, %v35, 0
    %v82 = vsel %vm71, %v36, 0
    %v85 = vsel %vm71, %v37, 0
    %v88 = vsel %vm71, %v38, 0
    %v91 = vsel %vm71, %v39, 0
    %v94 = vsel %vm71, %v40, 0
    %v97 = vsel %vm71, %v41, 0
    %v100 = vsel %vm71, %v42, 0
    %v103 = vsel %vm71, %v43, 0
    %v106 = vsel %vm71, %v44, 0
    %v109 = vsel %vm71, %v45, 0
    %v112 = vsel %vm71, %v46, 0
    %v115 = vsel %vm71, %v47, 0
    %v118 = vsel %vm71, %v48, 0
    %v121 = vsel %vm71, %v49, 0
    %v124 = vsel %vm71, %v50, 0
    %v127 = vsel %vm71, %v51, 0
    %v130 = vsel %vm71, %v52, 0
    %v133 = vsel %vm71, %v53, 0
    %v136 = vsel %vm71, %v54, 0
    %v139 = vsel %vm71, %v55, 0
    %v142 = vsel %vm71, %v56, 0
    %v145 = vsel %vm71, %v57, 0
    %v148 = vsel %vm71, %v58, 0
    %v151 = vsel %vm71, %v59, 0
    %v154 = vsel %vm71, %v60, 0
    %v157 = vsel %vm71, %v61, 0
    %v160 = vsel %vm71, %v62, 0
    %v163 = vsel %vm71, %v63, 0
    %v166 = vsel %vm71, %v64, 0
    %v169 = vsel %vm71, %v65, 0
    %171 = vmatprep.subr.mxu0 0.0
    %172 = vmatpush1.xpose.msra.mxu0 %v121
    %173 = vmatprep.subr.mxu0 0.0
    %174 = vmatpush1.xpose.msra.mxu0 %v118
    %175 = vmatprep.subr.mxu0 0.0
    %176 = vmatpush1.xpose.msra.mxu0 %v115
    %177 = vmatprep.subr.mxu0 0.0
    %178 = vmatpush1.xpose.msra.mxu0 %v112
    %179 = vmatprep.subr.mxu0 0.0
    %180 = vmatpush1.xpose.msra.mxu0 %v109
    %181 = vmatprep.subr.mxu0 0.0
    %182 = vmatpush1.xpose.msra.mxu0 %v106
    %183 = vmatprep.subr.mxu0 0.0
    %184 = vmatpush1.xpose.msra.mxu0 %v103
    %185 = vmatprep.subr.mxu0 0.0
    %186 = vmatpush1.xpose.msra.mxu0 %v100
    %187 = vmatprep.subr.mxu0 0.0
    %188 = vmatpush1.xpose.msra.mxu0 %v97
    %189 = vmatprep.subr.mxu0 0.0
    %190 = vmatpush1.xpose.msra.mxu0 %v94
    %191 = vmatprep.subr.mxu0 0.0
    %192 = vmatpush1.xpose.msra.mxu0 %v91
    %193 = vmatprep.subr.mxu0 0.0
    %194 = vmatpush1.xpose.msra.mxu0 %v88
    %195 = vmatprep.subr.mxu0 0.0
    %196 = vmatpush1.xpose.msra.mxu0 %v85
    %197 = vmatprep.subr.mxu0 0.0
    %198 = vmatpush1.xpose.msra.mxu0 %v82
    %199 = vmatprep.subr.mxu0 0.0
    %200 = vmatpush1.xpose.msra.mxu0 %v79
    %201 = vmatprep.subr.mxu0 0.0
    %202 = vmatpush1.xpose.msra.mxu0 %v76
    %203 = vmatprep.subr.mxu0 0.0
    %204 = vmatpush2.xpose.msra.mxu0 %v169
    %205 = vmatprep.subr.mxu0 0.0
    %206 = vmatpush2.xpose.msra.mxu0 %v166
    %207 = vmatprep.subr.mxu0 0.0
    %208 = vmatpush2.xpose.msra.mxu0 %v163
    %209 = vmatprep.subr.mxu0 0.0
    %210 = vmatpush2.xpose.msra.mxu0 %v160
    %211 = vmatprep.subr.mxu0 0.0
    %212 = vmatpush2.xpose.msra.mxu0 %v157
    %213 = vmatprep.subr.mxu0 0.0
    %214 = vmatpush2.xpose.msra.mxu0 %v154
    %215 = vmatprep.subr.mxu0 0.0
    %216 = vmatpush2.xpose.msra.mxu0 %v151
    %217 = vmatprep.subr.mxu0 0.0
    %218 = vmatpush2.xpose.msra.mxu0 %v148
    %219 = vmatprep.subr.mxu0 0.0
    %220 = vmatpush2.xpose.msra.mxu0 %v145
    %221 = vmatprep.subr.mxu0 0.0
    %222 = vmatpush2.xpose.msra.mxu0 %v142
    %223 = vmatprep.subr.mxu0 0.0
    %224 = vmatpush2.xpose.msra.mxu0 %v139
    %225 = vmatprep.subr.mxu0 0.0
    %226 = vmatpush2.xpose.msra.mxu0 %v136
    %227 = vmatprep.subr.mxu0 0.0
    %228 = vmatpush2.xpose.msra.mxu0 %v133
    %229 = vmatprep.subr.mxu0 0.0
    %230 = vmatpush2.xpose.msra.mxu0 %v130
    %231 = vmatprep.subr.mxu0 0.0
    %232 = vmatpush2.xpose.msra.mxu0 %v127
    %233 = vmatprep.subr.mxu0 0.0
    %234 = vmatpush2.xpose.msra.mxu0 %v124
    %235 = vmatprep.mubr.f32.mxu0 0.0
    %236 = vmatmul.mubr.f32.gmra.mxu0 %v73
    %v237 = vpop.f32.mrf.mxu0
    %v238 = vadd.f32 %v69, %v237
    %v239 = vpop.f32.mrf.mxu0
    %v240 = vadd.f32 %v69, %v239
    %241 = vdwg.mxu0
    %v242 = vmax.f32 %v238, 0.0
    %v243 = vmax.f32 %v240, 0.0
    %245 = vset.pattern.permute.xlu0 0
    %246 = vperm.xlu0 %245, %v24
    %v247 = vpop.permute.xlu0 %246
    %v249 = vmul.f32 %v242, %v247
    %v250 = vmul.f32 %v243, %v247
    %v251 = vrot.slane %v249, 4
    %v252 = vadd.f32 %v249, %v251
    %v253 = vrot.slane %v252, 2
    %v254 = vadd.f32 %v252, %v253
    %v255 = vrot.slane %v254, 1
    %v256 = vadd.f32 %v254, %v255
    %v257 = vrot.slane %v250, 4
    %v258 = vadd.f32 %v250, %v257
    %v259 = vrot.slane %v258, 2
    %v260 = vadd.f32 %v258, %v259
    %v261 = vrot.slane %v260, 1
    %v262 = vadd.f32 %v260, %v261
    %264 = vset.pattern.permute.xlu0 0
    %265 = vperm.xlu0 %264, %v25
    %v266 = vpop.permute.xlu0 %265
    %v268 = vlaneseq
    %v269 = vshrl.u32 %v268, 7
    %v270 = vsub.s32 0, %v269
    %v271 = vrot.slane %v266, %v270
    %v272 = vadd.f32 %v256, %v271
    %v273 = vadd.f32 %v262, %v271
    %v274 = vxor.u32 %v272, 2147483648
    %v275 = vxor.u32 %v273, 2147483648
    %v276 = vmul.f32 %v274, 1.442695
    %v277 = vpow.pop %v276
    %v278 = vmul.f32 %v275, 1.442695
    %v279 = vpow.pop %v278
    %v280 = vadd.f32 %v277, 1.0
    %v281 = vadd.f32 %v279, 1.0
    %v282 = vrcp.pop %v280
    %v283 = vmul.f32 1.0, %v282
    %v284 = vrcp.pop %v281
    %v285 = vmul.f32 1.0, %v284
    %v288 = vcombine.low %v283, %v285
    %v290 = vunpack.c.l.s4 1966171168
    %v291 = vunpack.c.0.s8 %v290
    %v292 = vlaneseq
    %v293 = vshrl.u32 %v292, 7
    %v294 = vsub.s32 %v291, %v293
    %v295 = vrot.slane %v288, %v294
    %v297 = vunpack.c.l.s4 1966171168
    %v298 = vunpack.c.0.s8 %v297
    %v299 = vlaneseq
    %v300 = vshrl.u32 %v299, 7
    %v301 = vsub.s32 %v298, %v300
    %v302 = vrot.slane %v295, %v301
    %s304 = sshra.s32 %s32, 7
    %s305 = sand.u32 %s32, 127
    %s306 = scalar_lea.vmem %s5, %s304
    %v307 = vlaneseq
    %vm308 = vcmp.ge.s32.totalorder %v307, 0
    %vm309 = vcmp.lt.s32.totalorder %v307, 256
    %vm310 = vmand %vm308, %vm309
    %311 = vst.msk [vmem:[%s306] sm:$0x3] %vm310, %v302
  $region26: #{_forward.1} parent=0 // loop_footer
    %s31 = sadd.s32 1, %s27
  $region27: #{_forward.1} parent=0 // loop_footer_branch
    %26 = sbr.rel target = $region23
  $region28: #{_forward.1} parent=0 // loop_exit
    _
  // Predicated region
  $region29: #{_forward.1} parent=0 // pred_check
    _
  $region30: #{_forward.1} parent=0 // pred_check_branch
    %313 = sbr.rel (0) target = $region32
  $region31: #{_forward.1} parent=0 // pred_region
    _
  $region32: #{_forward.1} parent=0 // pred_fallthru
    _
  // Predicated region
  $region33: #{_forward.1} parent=0 // pred_check
    _
  $region34: #{_forward.1} parent=0 // pred_check_branch
    %315 = sbr.rel (0) target = $region36
  $region35: #{_forward.1} parent=0 // pred_region
    _
  $region36: #{_forward.1} parent=0 // pred_fallthru
    _

</llo_original>
